<compile_context>
chip_gen: v7x
topology: tpu7x:2x2x1
jax: 0.10.0
libtpu: 0.0.40
codegen_flags: <defaults>
</compile_context>

<pallas_src>
import functools

import jax
import jax.numpy as jnp
from jax.experimental import pallas as pl
from jax.experimental.pallas import tpu as pltpu


def _cdiv(a: int, b: int) -> int:
    return -(-a // b)


def _round_up(a: int, b: int) -> int:
    return _cdiv(a, b) * b


def _nmse_kernel(x_ref, xhat_ref, out_ref, pw_acc, mse_acc, *, n_total, ragged):
    """Grid = (batch_tiles, spatial_tiles); spatial (axis 1) is the reduction axis."""
    s = pl.program_id(1)

    @pl.when(s == 0)
    def _init():
        pw_acc[...] = jnp.zeros_like(pw_acc)
        mse_acc[...] = jnp.zeros_like(mse_acc)

    x = x_ref[...].astype(jnp.float32)       # (btile, stile), lane-dense
    xh = xhat_ref[...].astype(jnp.float32)

    xc = x - 0.5                             # de-center only for the power term
    d = x - xh                               # -0.5 offsets cancel in the diff

    if ragged:
        # Zero out lanes past the true spatial extent (last spatial block).
        stile = x.shape[1]
        col = jax.lax.broadcasted_iota(jnp.int32, x.shape, 1) + s * stile
        valid = col < n_total
        xc = jnp.where(valid, xc, 0.0)
        d = jnp.where(valid, d, 0.0)

    pw = xc * xc
    ms = d * d

    # Lane-fold stile -> accumulator width with plain VPU adds (lane-aligned
    # static slices, no cross-lane work in the inner loop).
    w = pw_acc.shape[1]
    nchunks = pw.shape[1] // w
    pw_part = pw[:, :w]
    ms_part = ms[:, :w]
    for c in range(1, nchunks):
        pw_part = pw_part + pw[:, c * w:(c + 1) * w]
        ms_part = ms_part + ms[:, c * w:(c + 1) * w]
    pw_acc[...] += pw_part
    mse_acc[...] += ms_part

    @pl.when(s == pl.num_programs(1) - 1)
    def _finalize():
        power = jnp.sum(pw_acc[...], axis=1, keepdims=True)   # single XLU reduce
        mse = jnp.sum(mse_acc[...], axis=1, keepdims=True)
        # Faithful to PyTorch: no divide-by-zero guard.  Rows past B (ragged
        # last batch block) may be garbage/NaN but their writeback is dropped.
        out_ref[...] = mse / power


def nmse_loss(x_hat, x, reduction: str = "sum", *, btile: int = 128, stile=None):
    """Pallas equivalent of NMSELoss(reduction)(x_hat, x).

    x_hat, x: (B, 2, H, W) arrays (NCHW, channel 0 = real, 1 = imag).
    Any float dtype (f32 / bf16) accepted; accumulation is f32.  Returns a
    scalar float32.
    """
    assert x.shape == x_hat.shape and x.ndim == 4 and x.shape[1] == 2
    B, C, H, W = x.shape
    N = C * H * W

    # Lane-dense layout: flatten channels + spatial (row-major reshape, no copy).
    x2 = x.reshape(B, N)
    xh2 = x_hat.reshape(B, N)
    itemsize = max(jnp.dtype(x2.dtype).itemsize, jnp.dtype(xh2.dtype).itemsize)

    # --- batch tile: multiple of 8 (or full B).  Keep >= 2 batch blocks when
    # possible so the "parallel" axis feeds both v7x TensorCores. -------------
    if B < 8:
        btile_eff = B
    else:
        cap = max(8, (int(btile) // 8) * 8)
        btile_eff = min(cap, _round_up(_cdiv(B, 2), 8))

    # --- spatial tile: multiple of 128 (or full N).  Auto-sized so one input
    # block is ~4 MiB -> 2 inputs x 2 buffers ~= 16 MiB VMEM (fits v7x's 64 MiB
    # with plenty of headroom under the 32 MiB scoped limit). -----------------
    if stile is None:
        budget = 4 * 1024 * 1024
        stile_cap = (budget // max(1, btile_eff * itemsize)) // 128 * 128
        stile_cap = int(min(max(stile_cap, 128), 32768))
    else:
        stile_cap = max(128, (int(stile) // 128) * 128)
    stile_eff = N if N <= stile_cap else stile_cap
    ragged = (N % stile_eff) != 0

    grid = (_cdiv(B, btile_eff), _cdiv(N, stile_eff))
    acc_w = 128 if (stile_eff % 128) == 0 else stile_eff

    kernel = functools.partial(_nmse_kernel, n_total=N, ragged=ragged)

    cost = pl.CostEstimate(
        flops=6 * B * N,
        transcendentals=0,
        bytes_accessed=(x2.size * jnp.dtype(x2.dtype).itemsize
                        + xh2.size * jnp.dtype(xh2.dtype).itemsize
                        + B * 4),
    )

    per_sample = pl.pallas_call(
        kernel,
        out_shape=jax.ShapeDtypeStruct((B, 1), jnp.float32),
        grid_spec=pltpu.PrefetchScalarGridSpec(
            num_scalar_prefetch=0,
            grid=grid,
            in_specs=[
                pl.BlockSpec((btile_eff, stile_eff), lambda b, s: (b, s)),
                pl.BlockSpec((btile_eff, stile_eff), lambda b, s: (b, s)),
            ],
            out_specs=pl.BlockSpec((btile_eff, 1), lambda b, s: (b, 0)),
            scratch_shapes=[
                pltpu.VMEM((btile_eff, acc_w), jnp.float32),   # power partials
                pltpu.VMEM((btile_eff, acc_w), jnp.float32),   # mse partials
            ],
        ),
        compiler_params=pltpu.CompilerParams(
            dimension_semantics=("parallel", "arbitrary"),
            vmem_limit_bytes=32 * 1024 * 1024,
        ),
        cost_estimate=cost,
    )(x2, xh2)

    nmse = per_sample[:, 0]
    if reduction == "mean":
        return jnp.mean(nmse)
    return jnp.sum(nmse)   # 'sum' (default of NMSELoss)


def _nmse_loss_ref(x_hat, x, reduction: str = "sum"):
    """Pure-JAX reference mirroring NMSE_cuda + NMSELoss reduction."""
    B = x.shape[0]
    x_real = x[:, 0, :, :].reshape(B, -1) - 0.5
    x_imag = x[:, 1, :, :].reshape(B, -1) - 0.5
    xh_real = x_hat[:, 0, :, :].reshape(B, -1) - 0.5
    xh_imag = x_hat[:, 1, :, :].reshape(B, -1) - 0.5
    power = jnp.sum(x_real ** 2 + x_imag ** 2, axis=1)
    mse = jnp.sum((x_real - xh_real) ** 2 + (x_imag - xh_imag) ** 2, axis=1)
    nmse = mse / power
    return jnp.mean(nmse) if reduction == "mean" else jnp.sum(nmse)


if __name__ == "__main__":
    key = jax.random.PRNGKey(0)
    k1, k2, k3, k4, k5, k6 = jax.random.split(key, 6)

    # Small case consistent with the module: NCHW, 2 channels (real, imag).
    B, C, H, W = 2, 2, 16, 16
    x = jax.random.uniform(k1, (B, C, H, W), dtype=jnp.float32)
    x_hat = x + 0.05 * jax.random.normal(k2, (B, C, H, W), dtype=jnp.float32)

    for red in ("sum", "mean"):
        out = jax.block_until_ready(nmse_loss(x_hat, x, reduction=red))
        ref = _nmse_loss_ref(x_hat, x, reduction=red)
        assert jnp.allclose(out, ref, rtol=1e-4, atol=1e-6), (red, out, ref)

    # Ragged case: exercises multi-block batch (OOB last batch block), ragged
    # spatial tail (in-kernel masking), and multi-step accumulation.
    B2, H2, W2 = 10, 24, 20            # N = 960, not a multiple of stile=256
    xb = jax.random.uniform(k3, (B2, C, H2, W2), dtype=jnp.float32)
    xb_hat = xb + 0.05 * jax.random.normal(k4, (B2, C, H2, W2), dtype=jnp.float32)
    out2 = jax.block_until_ready(nmse_loss(xb_hat, xb, reduction="sum",
                                           btile=8, stile=256))
    ref2 = _nmse_loss_ref(xb_hat, xb, reduction="sum")
    assert jnp.allclose(out2, ref2, rtol=1e-4, atol=1e-6), (out2, ref2)

    # bf16 inputs (halves HBM traffic); kernel accumulates in f32.
    xc16 = jax.random.uniform(k5, (4, C, 16, 16), dtype=jnp.float32)
    xh16 = xc16 + 0.05 * jax.random.normal(k6, (4, C, 16, 16), dtype=jnp.float32)
    xb16, xhb16 = xc16.astype(jnp.bfloat16), xh16.astype(jnp.bfloat16)
    out3 = jax.block_until_ready(nmse_loss(xhb16, xb16, reduction="mean"))
    ref3 = _nmse_loss_ref(xhb16.astype(jnp.float32), xb16.astype(jnp.float32),
                          reduction="mean")
    assert jnp.allclose(out3, ref3, rtol=1e-3, atol=1e-5), (out3, ref3)

    print("KERNEL_OK")
</pallas_src>

<mosaic_0001>
module attributes {stable_mosaic.version = 11 : i64} {
  func.func @_nmse_kernel(%arg0: i32, %arg1: i32, %arg2: memref<2x512xf32, #tpu.memory_space<vmem>>, %arg3: memref<2x512xf32, #tpu.memory_space<vmem>>, %arg4: memref<2x1xf32, #tpu.memory_space<vmem>>, %arg5: memref<2x128xf32, #tpu.memory_space<vmem>>, %arg6: memref<2x128xf32, #tpu.memory_space<vmem>>) attributes {dimension_semantics = [#tpu.dimension_semantics<parallel>, #tpu.dimension_semantics<arbitrary>], iteration_bounds = array<i64: 1, 1>, scalar_prefetch = 0 : i64, scratch_operands = 2 : i64, tpu.core_type = #tpu.core_type<tc>, window_params = [{transform_indices = @transform_0, window_bounds = array<i64: 2, 512>}, {transform_indices = @transform_1, window_bounds = array<i64: 2, 512>}, {transform_indices = @transform_2, window_bounds = array<i64: 2, 1>}]} {
    %c0_i32 = arith.constant 0 : i32
    %0 = arith.cmpi eq, %arg1, %c0_i32 : i32
    %1 = arith.extui %0 : i1 to i32
    %c0_i32_0 = arith.constant 0 : i32
    %2 = arith.cmpi ne, %1, %c0_i32_0 : i32
    scf.if %2 {
      %cst_14 = arith.constant 0.000000e+00 : f32
      %33 = vector.broadcast %cst_14 : f32 to vector<2x128xf32>
      %c0_15 = arith.constant 0 : index
      %c0_16 = arith.constant 0 : index
      %34 = vector.load %arg5[%c0_15, %c0_16] : memref<2x128xf32, #tpu.memory_space<vmem>>, vector<2x128xf32>
      tpu.vector_store %arg5[%c0_15, %c0_16], %33 {strides = array<i32>} : memref<2x128xf32, #tpu.memory_space<vmem>>, vector<2x128xf32>,
      %cst_17 = arith.constant 0.000000e+00 : f32
      %35 = vector.broadcast %cst_17 : f32 to vector<2x128xf32>
      %c0_18 = arith.constant 0 : index
      %c0_19 = arith.constant 0 : index
      %36 = vector.load %arg6[%c0_18, %c0_19] : memref<2x128xf32, #tpu.memory_space<vmem>>, vector<2x128xf32>
      tpu.vector_store %arg6[%c0_18, %c0_19], %35 {strides = array<i32>} : memref<2x128xf32, #tpu.memory_space<vmem>>, vector<2x128xf32>,
    } else {
    }
    %c0 = arith.constant 0 : index
    %c0_1 = arith.constant 0 : index
    %3 = vector.load %arg2[%c0, %c0_1] : memref<2x512xf32, #tpu.memory_space<vmem>>, vector<2x512xf32>
    %c0_2 = arith.constant 0 : index
    %c0_3 = arith.constant 0 : index
    %4 = vector.load %arg3[%c0_2, %c0_3] : memref<2x512xf32, #tpu.memory_space<vmem>>, vector<2x512xf32>
    %cst = arith.constant 5.000000e-01 : f32
    %5 = vector.broadcast %cst : f32 to vector<2x512xf32>
    %6 = arith.subf %3, %5 : vector<2x512xf32>
    %7 = arith.subf %3, %4 : vector<2x512xf32>
    %8 = arith.mulf %6, %6 : vector<2x512xf32>
    %9 = arith.mulf %7, %7 : vector<2x512xf32>
    %10 = vector.extract_strided_slice %8 {offsets = [0, 0], sizes = [2, 128], strides = [1, 1]} : vector<2x512xf32> to vector<2x128xf32>
    %11 = vector.extract_strided_slice %9 {offsets = [0, 0], sizes = [2, 128], strides = [1, 1]} : vector<2x512xf32> to vector<2x128xf32>
    %12 = vector.extract_strided_slice %8 {offsets = [0, 128], sizes = [2, 128], strides = [1, 1]} : vector<2x512xf32> to vector<2x128xf32>
    %13 = arith.addf %10, %12 : vector<2x128xf32>
    %14 = vector.extract_strided_slice %9 {offsets = [0, 128], sizes = [2, 128], strides = [1, 1]} : vector<2x512xf32> to vector<2x128xf32>
    %15 = arith.addf %11, %14 : vector<2x128xf32>
    %16 = vector.extract_strided_slice %8 {offsets = [0, 256], sizes = [2, 128], strides = [1, 1]} : vector<2x512xf32> to vector<2x128xf32>
    %17 = arith.addf %13, %16 : vector<2x128xf32>
    %18 = vector.extract_strided_slice %9 {offsets = [0, 256], sizes = [2, 128], strides = [1, 1]} : vector<2x512xf32> to vector<2x128xf32>
    %19 = arith.addf %15, %18 : vector<2x128xf32>
    %20 = vector.extract_strided_slice %8 {offsets = [0, 384], sizes = [2, 128], strides = [1, 1]} : vector<2x512xf32> to vector<2x128xf32>
    %21 = arith.addf %17, %20 : vector<2x128xf32>
    %22 = vector.extract_strided_slice %9 {offsets = [0, 384], sizes = [2, 128], strides = [1, 1]} : vector<2x512xf32> to vector<2x128xf32>
    %23 = arith.addf %19, %22 : vector<2x128xf32>
    %c0_4 = arith.constant 0 : index
    %c0_5 = arith.constant 0 : index
    %24 = vector.load %arg5[%c0_4, %c0_5] : memref<2x128xf32, #tpu.memory_space<vmem>>, vector<2x128xf32>
    %25 = arith.addf %24, %21 : vector<2x128xf32>
    %c0_6 = arith.constant 0 : index
    %c0_7 = arith.constant 0 : index
    %26 = vector.load %arg5[%c0_6, %c0_7] : memref<2x128xf32, #tpu.memory_space<vmem>>, vector<2x128xf32>
    tpu.vector_store %arg5[%c0_6, %c0_7], %25 {strides = array<i32>} : memref<2x128xf32, #tpu.memory_space<vmem>>, vector<2x128xf32>,
    %c0_8 = arith.constant 0 : index
    %c0_9 = arith.constant 0 : index
    %27 = vector.load %arg6[%c0_8, %c0_9] : memref<2x128xf32, #tpu.memory_space<vmem>>, vector<2x128xf32>
    %28 = arith.addf %27, %23 : vector<2x128xf32>
    %c0_10 = arith.constant 0 : index
    %c0_11 = arith.constant 0 : index
    %29 = vector.load %arg6[%c0_10, %c0_11] : memref<2x128xf32, #tpu.memory_space<vmem>>, vector<2x128xf32>
    tpu.vector_store %arg6[%c0_10, %c0_11], %28 {strides = array<i32>} : memref<2x128xf32, #tpu.memory_space<vmem>>, vector<2x128xf32>,
    %c0_i32_12 = arith.constant 0 : i32
    %30 = arith.cmpi eq, %arg1, %c0_i32_12 : i32
    %31 = arith.extui %30 : i1 to i32
    %c0_i32_13 = arith.constant 0 : i32
    %32 = arith.cmpi ne, %31, %c0_i32_13 : i32
    scf.if %32 {
      %c0_14 = arith.constant 0 : index
      %c0_15 = arith.constant 0 : index
      %33 = vector.load %arg5[%c0_14, %c0_15] : memref<2x128xf32, #tpu.memory_space<vmem>>, vector<2x128xf32>
      %cst_16 = arith.constant dense<0.000000e+00> : vector<2xf32>
      %34 = vector.multi_reduction <add>, %33, %cst_16 [1] : vector<2x128xf32> to vector<2xf32>
      %35 = vector.shape_cast %34 : vector<2xf32> to vector<2x1xf32>
      %c0_17 = arith.constant 0 : index
      %c0_18 = arith.constant 0 : index
      %36 = vector.load %arg6[%c0_17, %c0_18] : memref<2x128xf32, #tpu.memory_space<vmem>>, vector<2x128xf32>
      %cst_19 = arith.constant dense<0.000000e+00> : vector<2xf32>
      %37 = vector.multi_reduction <add>, %36, %cst_19 [1] : vector<2x128xf32> to vector<2xf32>
      %38 = vector.shape_cast %37 : vector<2xf32> to vector<2x1xf32>
      %39 = arith.divf %38, %35 : vector<2x1xf32>
      %c0_20 = arith.constant 0 : index
      %c0_21 = arith.constant 0 : index
      %40 = vector.load %arg4[%c0_20, %c0_21] : memref<2x1xf32, #tpu.memory_space<vmem>>, vector<2x1xf32>
      tpu.vector_store %arg4[%c0_20, %c0_21], %39 {strides = array<i32>} : memref<2x1xf32, #tpu.memory_space<vmem>>, vector<2x1xf32>,
    } else {
    }
    return
  }
  func.func @transform_0(%arg0: i32, %arg1: i32) -> (i32, i32) {
    %c0_i32 = arith.constant 0 : i32
    return %arg0, %arg1 : i32, i32
  }
  func.func @transform_1(%arg0: i32, %arg1: i32) -> (i32, i32) {
    %c0_i32 = arith.constant 0 : i32
    return %arg0, %arg1 : i32, i32
  }
  func.func @transform_2(%arg0: i32, %arg1: i32) -> (i32, i32) {
    %c0_i32 = arith.constant 0 : i32
    %c0_i32_0 = arith.constant 0 : i32
    return %arg0, %c0_i32 : i32, i32
  }
}

</mosaic_0001>

<llo_original>
// kernel: tpu_custom_call.1
$region0: #{tpu_custom_call.1}
  #allocation0 [shape = 'u32[]', space=smem, size = 0x4, offset = 0x4, fixed_abs, tag = 'smem constant byte address 0x4 - core index']
  #allocation1 [shape = 'u32[144,128]{1,0:T(1,128)}', space=vmem, size = 0x12000, scoped, tag = 'internal scratch']
  #allocation2 [shape = 'f32[2,128]{1,0:T(2,128)}', space=vmem, size = 0x400, scoped, tag = 'scratch operand']
  #allocation3 [shape = 'f32[2,128]{1,0:T(2,128)}', space=vmem, size = 0x400, scoped, tag = 'scratch operand']
  %s0 = inlined_call_operand.hbm [shape: f32[2,512], index: 0, kind: input, shape index: {}]
  %s1 = inlined_call_operand.hbm [shape: f32[2,512], index: 1, kind: input, shape index: {}]
  %s2 = inlined_call_operand.vmem [shape: f32[2,1], index: 2, kind: output, shape index: {}]
  %s3 = sld [smem:[#allocation0]]
  $region34: #{tpu_custom_call.1} parent=0
    _
  %s5 = ssub.s32 1, %s3
  %s6 = scalar_select 0, %s5, %s3
  $region1: #{tpu_custom_call.1} parent=0
    #allocation4 [shape = 'u8[4096]{0}', space=vmem, size = 0x1000, scoped, tag = 'input window, operand 0, single buffered']
    #allocation5 [shape = 's32[1]{0}', space=sflag, size = 0x4, scoped, tag = 'scoped memory for tpu_custom_call.1']
    #allocation6 [shape = 'u8[4096]{0}', space=vmem, size = 0x1000, scoped, tag = 'input window, operand 1, single buffered']
    #allocation7 [shape = 's32[1]{0}', space=sflag, size = 0x4, scoped, tag = 'scoped memory for tpu_custom_call.1']
    %7 = vsyncpa [#allocation5], 0
    %8 = vsyncpa [#allocation7], 0
    // Predicated region
    $region2: #{tpu_custom_call.1} parent=1 // pred_check
      _
    $region3: #{tpu_custom_call.1} parent=1 // pred_check_branch
      %10 = sbr.rel (0) target = $region5
    $region4: #{tpu_custom_call.1} parent=1 // pred_region
      %s12 = ssub.s32 128, 128
      %13 = vsyncadd [#allocation5], %s12
      %s15 = sshll.u32 [#allocation4], 4
      %s16 = int_to_ptr.vmem [resolvable:$true] %s15
      %18 = dma.hbm_to_vmem [thread:$0]  %s0, 128, %s16, [#allocation5]
    $region5: #{tpu_custom_call.1} parent=1 // pred_fallthru
      _
    // Predicated region
    $region6: #{tpu_custom_call.1} parent=1 // pred_check
      _
    $region7: #{tpu_custom_call.1} parent=1 // pred_check_branch
      %20 = sbr.rel (0) target = $region9
    $region8: #{tpu_custom_call.1} parent=1 // pred_region
      %s22 = ssub.s32 128, 128
      %23 = vsyncadd [#allocation7], %s22
      %s25 = sshll.u32 [#allocation6], 4
      %s26 = int_to_ptr.vmem [resolvable:$true] %s25
      %28 = dma.hbm_to_vmem [thread:$0]  %s1, 128, %s26, [#allocation7]
    $region9: #{tpu_custom_call.1} parent=1 // pred_fallthru
      _
    // Predicated region
    $region10: #{tpu_custom_call.1} parent=1 // pred_check
      _
    $region11: #{tpu_custom_call.1} parent=1 // pred_check_branch
      %30 = sbr.rel (0) target = $region13
    $region12: #{tpu_custom_call.1} parent=1 // pred_region
      %31 = dma.done [#allocation5], 128
    $region13: #{tpu_custom_call.1} parent=1 // pred_fallthru
      _
    // Predicated region
    $region14: #{tpu_custom_call.1} parent=1 // pred_check
      _
    $region15: #{tpu_custom_call.1} parent=1 // pred_check_branch
      %33 = sbr.rel (0) target = $region17
    $region16: #{tpu_custom_call.1} parent=1 // pred_region
      %34 = dma.done [#allocation7], 128
    $region17: #{tpu_custom_call.1} parent=1 // pred_fallthru
      _
    %p35 = scmp.eq.s32.totalorder 0, 0
    // Predicated region
    $region18: #{tpu_custom_call.1} parent=1 // pred_check
      %p36 = pneg %p35
    $region19: #{tpu_custom_call.1} parent=1 // pred_check_branch
      %38 = sbr.rel (%p36) target = $region21
    $region20: #{tpu_custom_call.1} parent=1 // pred_region
      %39 = vst [vmem:[#allocation2] sm:$0x3] 0.0
      %40 = vst [vmem:[#allocation3] sm:$0x3] 0.0
    $region21: #{tpu_custom_call.1} parent=1 // pred_fallthru
      _
    %v41 = vld [vmem:[#allocation4] sm:$0xff]
    %v42 = vld [vmem:[#allocation6] sm:$0xff]
    %v43 = vsub.f32 %v41, 0.5
    %v44 = vsub.f32 %v41, %v42
    %v45 = vmul.f32 %v43, %v43
    %v46 = vmul.f32 %v44, %v44
    %v48 = vrot.slane %v45, 2
    %v50 = vadd.f32 %v45, %v48
    %v52 = vrot.slane %v46, 2
    %v54 = vadd.f32 %v46, %v52
    %v55 = vrot.slane %v45, 4
    %v57 = vadd.f32 %v50, %v55
    %v58 = vrot.slane %v46, 4
    %v60 = vadd.f32 %v54, %v58
    %v61 = vrot.slane %v45, 6
    %v63 = vadd.f32 %v57, %v61
    %v64 = vrot.slane %v46, 6
    %v66 = vadd.f32 %v60, %v64
    %v67 = vld [vmem:[#allocation2] sm:$0x3]
    %v68 = vadd.f32 %v67, %v63
    %69 = vst [vmem:[#allocation2] sm:$0x3] %v68
    %v70 = vld [vmem:[#allocation3] sm:$0x3]
    %v71 = vadd.f32 %v70, %v66
    %72 = vst [vmem:[#allocation3] sm:$0x3] %v71
    // Predicated region
    $region22: #{tpu_custom_call.1} parent=1 // pred_check
      %p73 = pneg %p35
    $region23: #{tpu_custom_call.1} parent=1 // pred_check_branch
      %75 = sbr.rel (%p73) target = $region25
    $region24: #{tpu_custom_call.1} parent=1 // pred_region
      %v76 = vld [vmem:[#allocation2] sm:$0x3]
      %vm77 = vcmask 1041408
      %v78 = vsel %vm77, %v76, 0.0
      %79 = vadd.xlane.f32.xlu0 %v78
      %v80 = vpop.xlane.xlu0 %79
      %v81 = vld [vmem:[#allocation3] sm:$0x3]
      %v82 = vsel %vm77, %v81, 0.0
      %83 = vadd.xlane.f32.xlu0 %v82
      %v84 = vpop.xlane.xlu0 %83
      %v85 = vrcp.pop %v80
      %v86 = vmul.f32 %v84, %v85
      %vm87 = vcmask 1024
      %88 = vst.msk [vmem:[%s2] sm:$0x3] %vm87, %v86
    $region25: #{tpu_custom_call.1} parent=1 // pred_fallthru
      _
    // Predicated region
    $region26: #{tpu_custom_call.1} parent=1 // pred_check
      _
    $region27: #{tpu_custom_call.1} parent=1 // pred_check_branch
      %90 = sbr.rel (0) target = $region29
    $region28: #{tpu_custom_call.1} parent=1 // pred_region
      _
    $region29: #{tpu_custom_call.1} parent=1 // pred_fallthru
      _
    // Predicated region
    $region30: #{tpu_custom_call.1} parent=1 // pred_check
      _
    $region31: #{tpu_custom_call.1} parent=1 // pred_check_branch
      %92 = sbr.rel (0) target = $region33
    $region32: #{tpu_custom_call.1} parent=1 // pred_region
      _
    $region33: #{tpu_custom_call.1} parent=1 // pred_fallthru
      _
    %93 = vsyncpa [#allocation5], 1
    %94 = vsyncpa [#allocation7], 1

</llo_original>
